<compile_context>
chip_gen: v7x
topology: tpu7x:2x2x1
jax: 0.10.0
libtpu: 0.0.40
codegen_flags: <defaults>
</compile_context>

<pallas_src>
import jax
import jax.numpy as jnp
from jax.experimental import pallas as pl
from jax.experimental.pallas import tpu as pltpu

_EPS = 1e-5
_VMEM_LIMIT = 32 * 1024 * 1024


def _cparams(semantics):
    return pltpu.CompilerParams(
        dimension_semantics=semantics, vmem_limit_bytes=_VMEM_LIMIT)


def _pick_images_per_step(n):
    """Largest Nb (<=8) dividing N that still leaves >=2 grid steps."""
    for nb in (8, 4, 2):
        if n % nb == 0 and n // nb >= 2:
            return nb
    return 1


# ---------------------------------------------------------------------------
# Host-side weight re-packing (tiny, done once per call)
# ---------------------------------------------------------------------------
def _band_weights(w_hwio, W):
    """(3, 3, Cin, Cout) HWIO -> (3, W*Cin, W*Cout) per-dy banded matrices.

    B[dy][xin*Cin + ci, xout*Cout + co] = w[dy, xin - xout + 1, ci, co]
    when xin - xout + 1 in {0, 1, 2}, else 0 (this encodes the W-direction
    taps and the same-padding along W).
    """
    _, _, cin, cout = w_hwio.shape
    xin = jnp.arange(W)[:, None]
    xout = jnp.arange(W)[None, :]
    kx = xin - xout + 1                                   # (W, W)
    valid = (kx >= 0) & (kx <= 2)
    b = w_hwio[:, jnp.clip(kx, 0, 2), :, :]               # (3, W, W, Cin, Cout)
    b = jnp.where(valid[None, :, :, None, None], b, 0.0)
    b = jnp.transpose(b, (0, 1, 3, 2, 4))                 # (3, W, Cin, W, Cout)
    return b.reshape(3, W * cin, W * cout)


def _block_diag_1x1(ws, W):
    """(Cin, Cout) 1x1-conv weight -> (W*Cin, W*Cout) block-diagonal matrix."""
    cin, cout = ws.shape
    eye = jnp.eye(W, dtype=ws.dtype)
    return (eye[:, None, :, None] * ws[None, :, None, :]).reshape(W * cin,
                                                                   W * cout)


# ---------------------------------------------------------------------------
# In-kernel helper: 3x3 conv of Nb lane-dense images via 3 banded matmuls
# ---------------------------------------------------------------------------
def _conv3x3_banded(o_2d_bf16, b_ref, pad_ref, Nb, H):
    """o_2d_bf16: (Nb*H, W*Cin) bf16.  b_ref: (3, W*Cin, W*Cout) bf16 ref.
    pad_ref: (Nb*(H+2), W*Cin) bf16 scratch (row-padded stack).
    Returns (Nb*(H+2)-2, W*Cout) f32; rows n*(H+2)+y (y < H) are the valid
    output rows of image n (the 2 rows between images are discarded)."""
    wc = o_2d_bf16.shape[1]
    hp = H + 2
    m_ext = Nb * hp - 2
    zero_row = jnp.zeros((1, wc), jnp.bfloat16)
    for n in range(Nb):
        base = n * hp
        pad_ref[base:base + 1, :] = zero_row
        pad_ref[base + H + 1:base + H + 2, :] = zero_row
        pad_ref[base + 1:base + 1 + H, :] = o_2d_bf16[n * H:(n + 1) * H, :]
    acc = jnp.dot(pad_ref[0:m_ext, :], b_ref[0],
                  preferred_element_type=jnp.float32)
    for dy in (1, 2):
        acc = acc + jnp.dot(pad_ref[dy:dy + m_ext, :], b_ref[dy],
                            preferred_element_type=jnp.float32)
    return acc


# ---------------------------------------------------------------------------
# Kernels
# ---------------------------------------------------------------------------
def _make_stats_kernel(Nb, H, WC):
    """bn1 batch stats: resident (2, W*Cin) accumulator (sum, sum-of-squares)."""
    def kernel(x_ref, o_ref):
        @pl.when(pl.program_id(0) == 0)
        def _init():
            o_ref[...] = jnp.zeros_like(o_ref)
        x = x_ref[...].reshape(Nb * H, WC)
        o_ref[0:1, :] += jnp.sum(x, axis=0, keepdims=True)
        o_ref[1:2, :] += jnp.sum(x * x, axis=0, keepdims=True)
    return kernel


def _make_conv1_kernel(Nb, H, W, Cin, Cout):
    hp = H + 2

    def kernel(x_ref, a1_ref, c1_ref, b1_ref, z_ref, st_ref, pad_ref):
        # bn1-apply + relu in lane-dense layout, single bf16 cast.
        x = x_ref[...].reshape(Nb * H, W * Cin)
        o1 = jnp.maximum(x * a1_ref[...] + c1_ref[...], 0.0)
        acc = _conv3x3_banded(o1.astype(jnp.bfloat16), b1_ref, pad_ref, Nb, H)
        # Write z1 (bf16) and accumulate lane-dense bn2 stat partials from the
        # f32 accumulator (valid rows only).
        s = jnp.zeros((1, W * Cout), jnp.float32)
        ss = jnp.zeros((1, W * Cout), jnp.float32)
        for n in range(Nb):
            zi = acc[n * hp:n * hp + H, :]
            z_ref[n, :, :] = zi.astype(jnp.bfloat16)
            s = s + jnp.sum(zi, axis=0, keepdims=True)
            ss = ss + jnp.sum(zi * zi, axis=0, keepdims=True)
        st_ref[0, 0:1, :] = s
        st_ref[0, 1:2, :] = ss
    return kernel


def _make_conv2_kernel(Nb, H, W, Cin, Cout, has_proj):
    hp = H + 2

    def kernel(*refs):
        if has_proj:
            (x_ref, a1_ref, c1_ref, z_ref, a2_ref, c2_ref, b2_ref, wsb_ref,
             out_ref, pad_ref) = refs
        else:
            (x_ref, a1_ref, c1_ref, z_ref, a2_ref, c2_ref, b2_ref,
             out_ref, pad_ref) = refs

        # shortcut = (1x1-conv of) relu(bn1(x)), recomputed from x.
        x = x_ref[...].reshape(Nb * H, W * Cin)
        o1 = jnp.maximum(x * a1_ref[...] + c1_ref[...], 0.0)
        if has_proj:
            sc = jnp.dot(o1.astype(jnp.bfloat16), wsb_ref[...],
                         preferred_element_type=jnp.float32)   # (Nb*H, W*Cout)
        else:
            sc = o1                                            # Cin == Cout

        # main path: relu(bn2(z1)) -> conv2, then residual add (no final relu).
        z = z_ref[...].reshape(Nb * H, W * Cout).astype(jnp.float32)
        o2 = jnp.maximum(z * a2_ref[...] + c2_ref[...], 0.0)
        acc = _conv3x3_banded(o2.astype(jnp.bfloat16), b2_ref, pad_ref, Nb, H)
        for n in range(Nb):
            out_ref[n, :, :] = acc[n * hp:n * hp + H, :] + sc[n * H:(n + 1) * H, :]
    return kernel


# ---------------------------------------------------------------------------
# Wrapper
# ---------------------------------------------------------------------------
def _fold_bn(stats, count, gamma, beta):
    """Fold training-mode BN (biased var) into per-channel scale/shift."""
    mean = stats[0] / count
    var = stats[1] / count - mean * mean
    a = gamma * jax.lax.rsqrt(var + _EPS)
    return a, beta - mean * a


def preact_block_pallas(x_nchw, params):
    """PreActBlock forward (training-mode BN, stride=1).

    x_nchw: (N, Cin, H, W) float32 -> (N, Cout, H, W) float32.
    """
    N, Cin, H, W = x_nchw.shape
    Cout = params["w1"].shape[-1]
    has_proj = "ws" in params
    cnt = N * H * W
    Nb = _pick_images_per_step(N)
    G = N // Nb
    hp = H + 2
    m_ext = Nb * hp - 2

    # NCHW -> NHWC once at the interface; NHWC -> (N, H, W*C) lane-dense is a
    # free contiguous reshape.
    x2d = jnp.transpose(x_nchw, (0, 2, 3, 1)).reshape(N, H, W * Cin)

    def const_spec(shape):
        return pl.BlockSpec(shape, lambda n: (0,) * len(shape))

    # ---- pass 1: bn1 batch stats (resident lane-dense accumulator) ----------
    stats1 = pl.pallas_call(
        _make_stats_kernel(Nb, H, W * Cin),
        grid=(G,),
        in_specs=[pl.BlockSpec((Nb, H, W * Cin), lambda n: (n, 0, 0))],
        out_specs=pl.BlockSpec((2, W * Cin), lambda n: (0, 0)),
        out_shape=jax.ShapeDtypeStruct((2, W * Cin), jnp.float32),
        compiler_params=_cparams(("arbitrary",)),
        cost_estimate=pl.CostEstimate(
            flops=3 * N * H * W * Cin, transcendentals=0,
            bytes_accessed=4 * (N * H * W * Cin + 2 * W * Cin)),
    )(x2d)
    a1, c1 = _fold_bn(stats1.reshape(2, W, Cin).sum(axis=1), cnt,
                      params["g1"], params["b1"])
    a1t = jnp.tile(a1, W).reshape(1, W * Cin)      # lane-dense per-channel
    c1t = jnp.tile(c1, W).reshape(1, W * Cin)

    b1 = _band_weights(params["w1"], W).astype(jnp.bfloat16)  # (3, W*Cin, W*Cout)

    # ---- pass 2: relu(bn1(x)) -> conv1 (z1 in bf16) + bn2 stat partials ------
    z1, st2 = pl.pallas_call(
        _make_conv1_kernel(Nb, H, W, Cin, Cout),
        grid=(G,),
        in_specs=[
            pl.BlockSpec((Nb, H, W * Cin), lambda n: (n, 0, 0)),
            const_spec((1, W * Cin)), const_spec((1, W * Cin)),
            const_spec((3, W * Cin, W * Cout)),
        ],
        out_specs=(
            pl.BlockSpec((Nb, H, W * Cout), lambda n: (n, 0, 0)),
            pl.BlockSpec((1, 2, W * Cout), lambda n: (n, 0, 0)),
        ),
        out_shape=(
            jax.ShapeDtypeStruct((N, H, W * Cout), jnp.bfloat16),
            jax.ShapeDtypeStruct((G, 2, W * Cout), jnp.float32),
        ),
        scratch_shapes=[pltpu.VMEM((Nb * hp, W * Cin), jnp.bfloat16)],
        compiler_params=_cparams(("parallel",)),
        cost_estimate=pl.CostEstimate(
            flops=2 * 3 * G * m_ext * (W * Cin) * (W * Cout)
                  + 8 * N * H * W * max(Cin, Cout),
            transcendentals=0,
            bytes_accessed=4 * N * H * W * Cin + 2 * N * H * W * Cout
                           + 2 * 3 * (W * Cin) * (W * Cout)
                           + 4 * G * 2 * W * Cout),
    )(x2d, a1t, c1t, b1)

    # ---- bn2 batch stats from the per-step lane-dense partials ---------------
    a2, c2 = _fold_bn(jnp.sum(st2, axis=0).reshape(2, W, Cout).sum(axis=1), cnt,
                      params["g2"], params["b2"])
    a2t = jnp.tile(a2, W).reshape(1, W * Cout)
    c2t = jnp.tile(c2, W).reshape(1, W * Cout)

    b2 = _band_weights(params["w2"], W).astype(jnp.bfloat16)  # (3, W*Cout, W*Cout)

    in_specs3 = [
        pl.BlockSpec((Nb, H, W * Cin), lambda n: (n, 0, 0)),
        const_spec((1, W * Cin)), const_spec((1, W * Cin)),
        pl.BlockSpec((Nb, H, W * Cout), lambda n: (n, 0, 0)),
        const_spec((1, W * Cout)), const_spec((1, W * Cout)),
        const_spec((3, W * Cout, W * Cout)),
    ]
    inputs3 = [x2d, a1t, c1t, z1, a2t, c2t, b2]
    proj_flops = 0
    if has_proj:
        wsb = _block_diag_1x1(params["ws"], W).astype(jnp.bfloat16)
        in_specs3.append(const_spec((W * Cin, W * Cout)))
        inputs3.append(wsb)
        proj_flops = 2 * N * H * (W * Cin) * (W * Cout)

    # ---- pass 3: relu(bn2(z1)) -> conv2 + shortcut + residual add -------------
    out2d = pl.pallas_call(
        _make_conv2_kernel(Nb, H, W, Cin, Cout, has_proj),
        grid=(G,),
        in_specs=in_specs3,
        out_specs=pl.BlockSpec((Nb, H, W * Cout), lambda n: (n, 0, 0)),
        out_shape=jax.ShapeDtypeStruct((N, H, W * Cout), jnp.float32),
        scratch_shapes=[pltpu.VMEM((Nb * hp, W * Cout), jnp.bfloat16)],
        compiler_params=_cparams(("parallel",)),
        cost_estimate=pl.CostEstimate(
            flops=2 * 3 * G * m_ext * (W * Cout) * (W * Cout) + proj_flops
                  + 10 * N * H * W * Cout,
            transcendentals=0,
            bytes_accessed=4 * N * H * W * Cin + 2 * N * H * W * Cout
                           + 4 * N * H * W * Cout
                           + 2 * 3 * (W * Cout) * (W * Cout)),
    )(*inputs3)

    return jnp.transpose(out2d.reshape(N, H, W, Cout), (0, 3, 1, 2))


# ---------------------------------------------------------------------------
# Parameters and pure-JAX reference (PyTorch PreActBlock semantics)
# ---------------------------------------------------------------------------
def init_params(key, in_planes, planes):
    """Deterministic synthetic parameters (shapes match PreActBlock.__init__)."""
    ks = jax.random.split(key, 8)
    p = {
        "w1": 0.1 * jax.random.normal(ks[0], (3, 3, in_planes, planes), jnp.float32),
        "g1": 1.0 + 0.1 * jax.random.normal(ks[1], (in_planes,), jnp.float32),
        "b1": 0.1 * jax.random.normal(ks[2], (in_planes,), jnp.float32),
        "w2": 0.1 * jax.random.normal(ks[3], (3, 3, planes, planes), jnp.float32),
        "g2": 1.0 + 0.1 * jax.random.normal(ks[4], (planes,), jnp.float32),
        "b2": 0.1 * jax.random.normal(ks[5], (planes,), jnp.float32),
    }
    if in_planes != planes:        # projection shortcut (stride=1 assumed)
        p["ws"] = 0.1 * jax.random.normal(ks[6], (in_planes, planes), jnp.float32)
    return p


def preact_block_ref(x_nchw, params):
    """Pure-JAX reference matching PyTorch PreActBlock.forward (train-mode BN)."""
    def bn(x, g, b):
        mean = jnp.mean(x, axis=(0, 2, 3), keepdims=True)
        var = jnp.mean((x - mean) ** 2, axis=(0, 2, 3), keepdims=True)
        return ((x - mean) * jax.lax.rsqrt(var + _EPS) * g.reshape(1, -1, 1, 1)
                + b.reshape(1, -1, 1, 1))

    def conv3x3(x, w_hwio):
        w_oihw = jnp.transpose(w_hwio, (3, 2, 0, 1))
        return jax.lax.conv_general_dilated(
            x, w_oihw, window_strides=(1, 1), padding=((1, 1), (1, 1)),
            dimension_numbers=("NCHW", "OIHW", "NCHW"))

    o1 = jax.nn.relu(bn(x_nchw, params["g1"], params["b1"]))
    if "ws" in params:
        cin, cout = params["ws"].shape
        w_oihw = jnp.transpose(params["ws"], (1, 0)).reshape(cout, cin, 1, 1)
        shortcut = jax.lax.conv_general_dilated(
            o1, w_oihw, window_strides=(1, 1), padding=((0, 0), (0, 0)),
            dimension_numbers=("NCHW", "OIHW", "NCHW"))
    else:
        shortcut = o1
    z1 = conv3x3(o1, params["w1"])
    o2 = jax.nn.relu(bn(z1, params["g2"], params["b2"]))
    return conv3x3(o2, params["w2"]) + shortcut


if __name__ == "__main__":
    key = jax.random.PRNGKey(0)
    k_x1, k_x2, k_p1, k_p2 = jax.random.split(key, 4)

    # bf16 MXU operands (f32 accumulation) + bf16 z1 -> loose tolerance vs f32.
    ATOL = RTOL = 5e-2

    # Case 1: projection shortcut (in_planes != planes), N=2 -> 1 image/step.
    x1 = jax.random.normal(k_x1, (2, 4, 16, 16), jnp.float32)
    params1 = init_params(k_p1, in_planes=4, planes=8)
    out1 = jax.block_until_ready(preact_block_pallas(x1, params1))
    ref1 = preact_block_ref(x1, params1)
    assert out1.shape == (2, 8, 16, 16)
    err1 = float(jnp.max(jnp.abs(out1 - ref1)))
    assert jnp.allclose(out1, ref1, atol=ATOL, rtol=RTOL), (
        f"projection case mismatch, max |err| = {err1}")

    # Case 2: identity shortcut, N=4 -> 2 images per grid step (batched blocks).
    x2 = jax.random.normal(k_x2, (4, 8, 16, 16), jnp.float32)
    params2 = init_params(k_p2, in_planes=8, planes=8)
    out2 = jax.block_until_ready(preact_block_pallas(x2, params2))
    ref2 = preact_block_ref(x2, params2)
    assert out2.shape == (4, 8, 16, 16)
    err2 = float(jnp.max(jnp.abs(out2 - ref2)))
    assert jnp.allclose(out2, ref2, atol=ATOL, rtol=RTOL), (
        f"identity case mismatch, max |err| = {err2}")

    print("KERNEL_OK")
</pallas_src>

<mosaic_0001>
module attributes {stable_mosaic.version = 11 : i64} {
  func.func @kernel(%arg0: i32, %arg1: memref<1x16x64xf32, #tpu.memory_space<vmem>>, %arg2: memref<2x64xf32, #tpu.memory_space<vmem>>) attributes {dimension_semantics = [#tpu.dimension_semantics<arbitrary>], iteration_bounds = array<i64: 2>, scalar_prefetch = 0 : i64, scratch_operands = 0 : i64, tpu.core_type = #tpu.core_type<tc>, window_params = [{transform_indices = @transform_0, window_bounds = array<i64: 1, 16, 64>}, {pipeline_mode = #tpu.pipeline_mode<synchronous>, transform_indices = @transform_1, window_bounds = array<i64: 2, 64>}]} {
    %c0_i32 = arith.constant 0 : i32
    %0 = arith.cmpi eq, %arg0, %c0_i32 : i32
    %1 = arith.extui %0 : i1 to i32
    %c0_i32_0 = arith.constant 0 : i32
    %2 = arith.cmpi ne, %1, %c0_i32_0 : i32
    scf.if %2 {
      %cst_11 = arith.constant 0.000000e+00 : f32
      %16 = vector.broadcast %cst_11 : f32 to vector<2x64xf32>
      %c0_12 = arith.constant 0 : index
      %c0_13 = arith.constant 0 : index
      %17 = vector.load %arg2[%c0_12, %c0_13] : memref<2x64xf32, #tpu.memory_space<vmem>>, vector<2x64xf32>
      tpu.vector_store %arg2[%c0_12, %c0_13], %16 {strides = array<i32>} : memref<2x64xf32, #tpu.memory_space<vmem>>, vector<2x64xf32>,
    } else {
    }
    %c0 = arith.constant 0 : index
    %c0_1 = arith.constant 0 : index
    %c0_2 = arith.constant 0 : index
    %3 = vector.load %arg1[%c0, %c0_1, %c0_2] : memref<1x16x64xf32, #tpu.memory_space<vmem>>, vector<1x16x64xf32>
    %4 = vector.shape_cast %3 : vector<1x16x64xf32> to vector<16x64xf32>
    %c0_3 = arith.constant 0 : index
    %c0_4 = arith.constant 0 : index
    %5 = vector.load %arg2[%c0_3, %c0_4] : memref<2x64xf32, #tpu.memory_space<vmem>>, vector<1x64xf32>
    %cst = arith.constant dense<0.000000e+00> : vector<64xf32>
    %6 = vector.multi_reduction <add>, %4, %cst [0] : vector<16x64xf32> to vector<64xf32>
    %7 = vector.shape_cast %6 : vector<64xf32> to vector<1x64xf32>
    %8 = arith.addf %5, %7 : vector<1x64xf32>
    %c0_5 = arith.constant 0 : index
    %c0_6 = arith.constant 0 : index
    %9 = vector.load %arg2[%c0_5, %c0_6] : memref<2x64xf32, #tpu.memory_space<vmem>>, vector<1x64xf32>
    tpu.vector_store %arg2[%c0_5, %c0_6], %8 {strides = array<i32>} : memref<2x64xf32, #tpu.memory_space<vmem>>, vector<1x64xf32>,
    %c1 = arith.constant 1 : index
    %c0_7 = arith.constant 0 : index
    %10 = vector.load %arg2[%c1, %c0_7] : memref<2x64xf32, #tpu.memory_space<vmem>>, vector<1x64xf32>
    %11 = arith.mulf %4, %4 : vector<16x64xf32>
    %cst_8 = arith.constant dense<0.000000e+00> : vector<64xf32>
    %12 = vector.multi_reduction <add>, %11, %cst_8 [0] : vector<16x64xf32> to vector<64xf32>
    %13 = vector.shape_cast %12 : vector<64xf32> to vector<1x64xf32>
    %14 = arith.addf %10, %13 : vector<1x64xf32>
    %c1_9 = arith.constant 1 : index
    %c0_10 = arith.constant 0 : index
    %15 = vector.load %arg2[%c1_9, %c0_10] : memref<2x64xf32, #tpu.memory_space<vmem>>, vector<1x64xf32>
    tpu.vector_store %arg2[%c1_9, %c0_10], %14 {strides = array<i32>} : memref<2x64xf32, #tpu.memory_space<vmem>>, vector<1x64xf32>,
    return
  }
  func.func @transform_0(%arg0: i32) -> (i32, i32, i32) {
    %c0_i32 = arith.constant 0 : i32
    %c0_i32_0 = arith.constant 0 : i32
    %c0_i32_1 = arith.constant 0 : i32
    return %arg0, %c0_i32, %c0_i32_0 : i32, i32, i32
  }
  func.func @transform_1(%arg0: i32) -> (i32, i32) {
    %c0_i32 = arith.constant 0 : i32
    %c0_i32_0 = arith.constant 0 : i32
    %c0_i32_1 = arith.constant 0 : i32
    return %c0_i32, %c0_i32_0 : i32, i32
  }
}

</mosaic_0001>

<llo_original>
// kernel: tpu_custom_call.1
$region0: #{tpu_custom_call.1}
  #allocation0 [shape = 'u32[]', space=smem, size = 0x4, offset = 0x4, fixed_abs, tag = 'smem constant byte address 0x4 - core index']
  #allocation1 [shape = 'u32[144,128]{1,0:T(1,128)}', space=vmem, size = 0x12000, scoped, tag = 'internal scratch']
  %s0 = inlined_call_operand.hbm [shape: f32[2,16,64], index: 0, kind: input, shape index: {}]
  %s1 = inlined_call_operand.hbm [shape: f32[2,64], index: 1, kind: output, shape index: {}]
  %s2 = sld [smem:[#allocation0]]
  $region45: #{tpu_custom_call.1} parent=0
    _
  %s4 = ssub.s32 1, %s2
  %s5 = scalar_select 0, %s4, %s2
  $region1: #{tpu_custom_call.1} parent=0
    #allocation2 [shape = 'u8[16384]{0}', space=vmem, size = 0x4000, scoped, tag = 'input window, operand 0']
    #allocation3 [shape = 's32[2]{0}', space=sflag, size = 0x8, scoped, tag = 'scoped memory for tpu_custom_call.1']
    #allocation4 [shape = 's32[2]{0}', space=sflag, size = 0x8, scoped, tag = 'scoped memory for tpu_custom_call.1']
    #allocation5 [shape = 'u8[1024]{0}', space=vmem, size = 0x400, scoped, tag = 'output window, operand 0, single buffered']
    %6 = vsyncpa [#allocation3], 0
    %s7 = scalar_lea.sflag [#allocation3], 1
    %8 = vsyncpa %s7, 0
    %9 = vsyncpa [#allocation4], 0
    loop: start=0, step=1, limit=4
    $region2: #{tpu_custom_call.1} parent=1 // loop_pre_header
      _
    $region3: #{tpu_custom_call.1} parent=1 // loop_header
      %s11 = sphi 0, %s15
      %p12 = scmp.ge.s32.totalorder %s11, 4
      %s21 = sphi 0, %s23
      %s24 = sphi 0, %s21
      %s25 = sphi 0, %s24
      %s41 = sphi 0, %s25
      %s45 = sphi 0, %s45
      %s47 = sphi 0, %s45
      %s48 = sphi 0, %s47
      %s62 = sphi 0, %s48
    $region4: #{tpu_custom_call.1} parent=1 // loop_header_branch
      %14 = sbr.rel (%p12) target = $region8
    $region5: #{tpu_custom_call.1} parent=1 // loop_body
      %s16 = ssub.s32 %s11, 1
      %s17 = ssub.s32 %s11, 2
      %s18 = sadd.s32 %s11, 1
      %s19 = ssub.s32 %s11, %s18
      %p20 = scmp.eq.s32.totalorder %s19, 0
      %s22 = sadd.s32 %s21, 1
      %s23 = scalar_select %p20, %s21, %s22
      %p26 = pneg %p20
      %p27 = scmp.eq.s32.totalorder %s11, 1
      %p28 = por %p26, %p27
      %p29 = scmp.ne.s32.totalorder %s21, %s24
      %p30 = scmp.eq.s32.totalorder %s11, 0
      %p31 = por %p29, %p30
      %p32 = scmp.ne.s32.totalorder %s21, %s24
      %p33 = scmp.eq.s32.totalorder %s16, 1
      %p34 = por %p32, %p33
      %p35 = scmp.ne.s32.totalorder %s24, %s25
      %p36 = scmp.eq.s32.totalorder %s16, 0
      %p37 = por %p35, %p36
      %p38 = scmp.ne.s32.totalorder %s24, %s25
      %p39 = scmp.eq.s32.totalorder %s17, 1
      %p40 = por %p38, %p39
      %p42 = scmp.ne.s32.totalorder %s25, %s41
      %p43 = scmp.eq.s32.totalorder %s17, 0
      %p44 = por %p42, %p43
      %s46 = sadd.s32 %s45, 1
      %p49 = scmp.eq.s32.totalorder %s11, 1
      %p50 = scmp.ne.s32.totalorder %s45, %s47
      %p51 = scmp.eq.s32.totalorder %s11, 0
      %p52 = por %p50, %p51
      %p53 = scmp.ne.s32.totalorder %s45, %s47
      %p54 = scmp.eq.s32.totalorder %s16, 1
      %p55 = por %p53, %p54
      %p56 = scmp.ne.s32.totalorder %s47, %s48
      %p57 = scmp.eq.s32.totalorder %s16, 0
      %p58 = por %p56, %p57
      %p59 = scmp.ne.s32.totalorder %s47, %s48
      %p60 = scmp.eq.s32.totalorder %s17, 1
      %p61 = por %p59, %p60
      %p63 = scmp.ne.s32.totalorder %s48, %s62
      %p64 = scmp.eq.s32.totalorder %s17, 0
      %p65 = por %p63, %p64
      %p66 = scmp.le.s32.totalorder 1, %s11
      %p67 = scmp.lt.s32.totalorder %s11, 3
      %p68 = pnand %p66, %p67
      %p69 = pneg %p68
      // Predicated region
      $region9: #{tpu_custom_call.1} parent=5 // pred_check
        _
      $region10: #{tpu_custom_call.1} parent=5 // pred_check_branch
        %71 = sbr.rel (%p68) target = $region12
      $region11: #{tpu_custom_call.1} parent=5 // pred_region
        %s72 = ssub.s32 %s11, 1
      $region12: #{tpu_custom_call.1} parent=5 // pred_fallthru
        _
      %p73 = scmp.lt.s32.totalorder %s11, 2
      // Predicated region
      $region13: #{tpu_custom_call.1} parent=5 // pred_check
        %p74 = pneg %p73
      $region14: #{tpu_custom_call.1} parent=5 // pred_check_branch
        %76 = sbr.rel (%p74) target = $region16
      $region15: #{tpu_custom_call.1} parent=5 // pred_region
        // Predicated region
        $region17: #{tpu_custom_call.1} parent=15 // pred_check
          %p77 = pneg %p31
        $region18: #{tpu_custom_call.1} parent=15 // pred_check_branch
          %79 = sbr.rel (%p77) target = $region20
        $region19: #{tpu_custom_call.1} parent=15 // pred_region
          %s80 = sand.u32 %s21, 1
          %s81 = scalar_lea.sflag [#allocation3], %s80
          %s82 = sand.u32 %s21, 1
          %s83 = smul.addr %s82, 16
          %s84 = scalar_lea.vmem [#allocation2], %s83
          %s86 = ssub.s32 256, 256
          %87 = vsyncadd %s81, %s86
          %s88 = smul.addr %s11, 2
          %s89 = smul.addr %s88, 128
          %s90 = scalar_lea.hbm %s0, %s89
          %s91 = sshll.u32 %s84, 4
          %s92 = int_to_ptr.vmem [resolvable:$true] %s91
          %97 = dma.hbm_to_vmem [thread:$0]  %s90, 256, %s92, %s81, 128, 128, 8
        $region20: #{tpu_custom_call.1} parent=15 // pred_fallthru
          _
      $region16: #{tpu_custom_call.1} parent=5 // pred_fallthru
        _
      %p98 = scmp.le.s32.totalorder 1, %s11
      %p99 = scmp.lt.s32.totalorder %s11, 3
      %p100 = pnand %p98, %p99
      %p101 = pneg %p100
      // Predicated region
      $region21: #{tpu_custom_call.1} parent=5 // pred_check
        _
      $region22: #{tpu_custom_call.1} parent=5 // pred_check_branch
        %103 = sbr.rel (%p100) target = $region24
      $region23: #{tpu_custom_call.1} parent=5 // pred_region
        %s104 = ssub.s32 %s11, 1
        %s105 = sand.u32 %s24, 1
        %s106 = scalar_lea.sflag [#allocation3], %s105
        %s107 = sand.u32 %s24, 1
        %s108 = smul.addr %s107, 16
        %s109 = scalar_lea.vmem [#allocation2], %s108
        // Predicated region
        $region25: #{tpu_custom_call.1} parent=23 // pred_check
          %p110 = pneg %p37
        $region26: #{tpu_custom_call.1} parent=23 // pred_check_branch
          %112 = sbr.rel (%p110) target = $region28
        $region27: #{tpu_custom_call.1} parent=23 // pred_region
          %113 = dma.done %s106, 256
        $region28: #{tpu_custom_call.1} parent=23 // pred_fallthru
          _
        %s114 = sand.u32 %s24, 1
        %s115 = scalar_lea.sflag [#allocation3], %s114
        %s116 = sand.u32 %s24, 1
        %s117 = smul.addr %s116, 16
        %s118 = scalar_lea.vmem [#allocation2], %s117
        %p119 = pneg %p37
        %p120 = pneg %p34
        %p121 = pneg %p58
        %p122 = pneg %p55
        %p123 = scmp.eq.s32.totalorder %s16, 0
        // Predicated region
        $region29: #{tpu_custom_call.1} parent=23 // pred_check
          %p124 = pneg %p123
        $region30: #{tpu_custom_call.1} parent=23 // pred_check_branch
          %126 = sbr.rel (%p124) target = $region32
        $region31: #{tpu_custom_call.1} parent=23 // pred_region
          %vm127 = vcmask 517120
          %128 = vst.msk [vmem:[#allocation5] sm:$0x3] %vm127, 0.0
        $region32: #{tpu_custom_call.1} parent=23 // pred_fallthru
          _
        %v129 = vld [vmem:[%s109] sm:$0xff]
        %v130 = vld [vmem:[%s109 + $0x8] sm:$0xff]
        %v131 = vld [vmem:[#allocation5] sm:$0x1]
        %vm132 = vcmask 523264
        %v133 = vsel %vm132, %v129, 0.0
        %v134 = vsel %vm132, %v130, 0.0
        %v135 = vadd.f32 %v133, %v134
        %v136 = vrot.slane %v135, 4
        %v137 = vadd.f32 %v135, %v136
        %v138 = vrot.slane %v137, 2
        %v139 = vadd.f32 %v137, %v138
        %v140 = vrot.slane %v139, 1
        %v141 = vadd.f32 %v139, %v140
        %v142 = vadd.f32 %v131, %v141
        %vm143 = vcmask 516096
        %144 = vst.msk [vmem:[#allocation5] sm:$0x1] %vm143, %v142
        %v145 = vld [vmem:[#allocation5 + $0x1] sm:$0x1]
        %v146 = vmul.f32 %v129, %v129
        %v147 = vmul.f32 %v130, %v130
        %v148 = vsel %vm132, %v146, 0.0
        %v149 = vsel %vm132, %v147, 0.0
        %v150 = vadd.f32 %v148, %v149
        %v151 = vrot.slane %v150, 4
        %v152 = vadd.f32 %v150, %v151
        %v153 = vrot.slane %v152, 2
        %v154 = vadd.f32 %v152, %v153
        %v155 = vrot.slane %v154, 1
        %v156 = vadd.f32 %v154, %v155
        %v157 = vadd.f32 %v145, %v156
        %158 = vst.msk [vmem:[#allocation5 + $0x1] sm:$0x1] %vm143, %v157
        // Predicated region
        $region33: #{tpu_custom_call.1} parent=23 // pred_check
          %p159 = pneg %p55
        $region34: #{tpu_custom_call.1} parent=23 // pred_check_branch
          %161 = sbr.rel (%p159) target = $region36
        $region35: #{tpu_custom_call.1} parent=23 // pred_region
          %s163 = ssub.s32 32, 32
          %164 = vsyncadd [#allocation4], %s163
          %s166 = sshll.u32 [#allocation5], 4
          %s167 = int_to_ptr.vmem [resolvable:$true] %s166
          %169 = dma.vmem_to_hbm [thread:$0]  %s167, 32, %s1, [#allocation4]
        $region36: #{tpu_custom_call.1} parent=23 // pred_fallthru
          _
        // Predicated region
        $region37: #{tpu_custom_call.1} parent=23 // pred_check
          %p170 = pneg %p55
        $region38: #{tpu_custom_call.1} parent=23 // pred_check_branch
          %172 = sbr.rel (%p170) target = $region40
        $region39: #{tpu_custom_call.1} parent=23 // pred_region
          %173 = dma.done [#allocation4], 32
        $region40: #{tpu_custom_call.1} parent=23 // pred_fallthru
          _
      $region24: #{tpu_custom_call.1} parent=5 // pred_fallthru
        _
      %p174 = scmp.le.s32.totalorder 2, %s11
      // Predicated region
      $region41: #{tpu_custom_call.1} parent=5 // pred_check
        %p175 = pneg %p174
      $region42: #{tpu_custom_call.1} parent=5 // pred_check_branch
        %177 = sbr.rel (%p175) target = $region44
      $region43: #{tpu_custom_call.1} parent=5 // pred_region
        %s178 = ssub.s32 %s11, 2
      $region44: #{tpu_custom_call.1} parent=5 // pred_fallthru
        _
    $region6: #{tpu_custom_call.1} parent=1 // loop_footer
      %s15 = sadd.s32 1, %s11
    $region7: #{tpu_custom_call.1} parent=1 // loop_footer_branch
      %10 = sbr.rel target = $region3
    $region8: #{tpu_custom_call.1} parent=1 // loop_exit
      _
    %179 = vsyncpa [#allocation3], 1
    %s180 = scalar_lea.sflag [#allocation3], 1
    %181 = vsyncpa %s180, 1
    %182 = vsyncpa [#allocation4], 1
    %s183 = scalar_lea.sflag [#allocation4], 1
    %184 = vsyncpa %s183, 1

</llo_original>
